<compile_context>
chip_gen: v7x
topology: tpu7x:2x2x1
jax: 0.10.0
libtpu: 0.0.40
codegen_flags: <defaults>
</compile_context>

<pallas_src>
import functools

import jax
import jax.numpy as jnp
from jax.experimental import pallas as pl
from jax.experimental.pallas import tpu as pltpu


# ----------------------------------------------------------------------------
# Helpers
# ----------------------------------------------------------------------------

def _round_up(x, m):
    return (x + m - 1) // m * m


def _pick_tiles(M, N, K):
    """Adaptive tile sizes: avoid padding small K/N up to huge fixed tiles."""
    Kp = _round_up(K, 128)
    if Kp <= 1024:
        TK = Kp
    else:
        TK = max(t for t in range(128, 1025, 128) if Kp % t == 0)

    Np = _round_up(N, 128)
    if Np <= 256:
        TN = Np
    else:
        TN = 256 if Np % 256 == 0 else 128

    if M >= 256:
        TM = 256
        Mp = _round_up(M, TM)
    else:
        Mp = _round_up(M, 8)
        TM = Mp
    return TM, TN, TK, Mp, Np, Kp


# ----------------------------------------------------------------------------
# Pallas kernels
# ----------------------------------------------------------------------------

def _apply_act(y, activation):
    if activation == "relu":
        return jnp.maximum(y, 0.0)
    if activation == "sigmoid":
        return 1.0 / (1.0 + jnp.exp(-y))
    return y


def _mm_affine_kernel(a_ref, w_ref, s_ref, b_ref, o_ref, acc_ref, *,
                      activation):
    """C = A @ W ; C = C*scale + shift ; activation  (bf16 MXU, f32 acc)."""
    @pl.when(pl.program_id(2) == 0)
    def _():
        acc_ref[...] = jnp.zeros_like(acc_ref)

    acc_ref[...] += jnp.dot(a_ref[...], w_ref[...],
                            preferred_element_type=jnp.float32)

    @pl.when(pl.program_id(2) == pl.num_programs(2) - 1)
    def _():
        y = acc_ref[...] * s_ref[...] + b_ref[...]
        y = _apply_act(y, activation)
        o_ref[...] = y.astype(o_ref.dtype)


def _mm_affine_res_kernel(a_ref, w_ref, s_ref, b_ref, r_ref, o_ref, acc_ref, *,
                          activation):
    """Same as above with a fused residual add in the epilogue."""
    @pl.when(pl.program_id(2) == 0)
    def _():
        acc_ref[...] = jnp.zeros_like(acc_ref)

    acc_ref[...] += jnp.dot(a_ref[...], w_ref[...],
                            preferred_element_type=jnp.float32)

    @pl.when(pl.program_id(2) == pl.num_programs(2) - 1)
    def _():
        y = acc_ref[...] * s_ref[...] + b_ref[...] + \
            r_ref[...].astype(jnp.float32)
        y = _apply_act(y, activation)
        o_ref[...] = y.astype(o_ref.dtype)


def matmul_affine(a, w, scale, shift, residual=None, *, activation,
                  out_dtype):
    """(M,K) @ (K,N) + per-column affine + optional residual + activation."""
    M, K = a.shape
    K2, N = w.shape
    assert K == K2
    TM, TN, TK, Mp, Np, Kp = _pick_tiles(M, N, K)

    a_p = a.astype(jnp.bfloat16)
    if (Mp, Kp) != (M, K):
        a_p = jnp.pad(a_p, ((0, Mp - M), (0, Kp - K)))
    w_p = w.astype(jnp.bfloat16)
    if (Kp, Np) != (K, N):
        w_p = jnp.pad(w_p, ((0, Kp - K), (0, Np - N)))
    s_p = scale.astype(jnp.float32).reshape(1, N)
    b_p = shift.astype(jnp.float32).reshape(1, N)
    if Np != N:
        s_p = jnp.pad(s_p, ((0, 0), (0, Np - N)))
        b_p = jnp.pad(b_p, ((0, 0), (0, Np - N)))

    grid = (Mp // TM, Np // TN, Kp // TK)
    out_bytes = Mp * Np * (4 if out_dtype == jnp.float32 else 2)
    cost = pl.CostEstimate(
        flops=2 * M * N * K,
        transcendentals=(M * N if activation == "sigmoid" else 0),
        bytes_accessed=Mp * Kp * 2 + Kp * Np * 2 + out_bytes)

    a_spec = pl.BlockSpec((TM, TK), lambda i, j, k: (i, k))
    w_spec = pl.BlockSpec((TK, TN), lambda i, j, k: (k, j))
    s_spec = pl.BlockSpec((1, TN), lambda i, j, k: (0, j))
    o_spec = pl.BlockSpec((TM, TN), lambda i, j, k: (i, j))

    if residual is None:
        kernel = functools.partial(_mm_affine_kernel, activation=activation)
        in_specs = [a_spec, w_spec, s_spec, s_spec]
        args = (a_p, w_p, s_p, b_p)
    else:
        r_p = residual.reshape(M, N).astype(jnp.bfloat16)
        if (Mp, Np) != (M, N):
            r_p = jnp.pad(r_p, ((0, Mp - M), (0, Np - N)))
        kernel = functools.partial(_mm_affine_res_kernel,
                                   activation=activation)
        r_spec = pl.BlockSpec((TM, TN), lambda i, j, k: (i, j))
        in_specs = [a_spec, w_spec, s_spec, s_spec, r_spec]
        args = (a_p, w_p, s_p, b_p, r_p)

    out = pl.pallas_call(
        kernel,
        out_shape=jax.ShapeDtypeStruct((Mp, Np), out_dtype),
        grid_spec=pltpu.PrefetchScalarGridSpec(
            num_scalar_prefetch=0,
            grid=grid,
            in_specs=in_specs,
            out_specs=o_spec,
            scratch_shapes=[pltpu.VMEM((TM, TN), jnp.float32)],
        ),
        compiler_params=pltpu.CompilerParams(
            dimension_semantics=("parallel", "parallel", "arbitrary")),
        cost_estimate=cost,
    )(*args)

    if (Mp, Np) != (M, N):
        out = out[:M, :N]
    return out


def _maxpool_reduce_kernel(x_ref, o_ref):
    m = x_ref[0]
    for t in range(1, x_ref.shape[0]):
        m = jnp.maximum(m, x_ref[t])
    o_ref[...] = m


# ----------------------------------------------------------------------------
# Conv / pool / upsample wrappers
# ----------------------------------------------------------------------------

@functools.partial(jax.jit,
                   static_argnames=("stride", "padding", "activation",
                                    "out_dtype"))
def conv2d_affine(x, w, scale, shift, residual=None, *, stride=1, padding=0,
                  activation="relu", out_dtype=jnp.bfloat16):
    """x: (B,H,W,Cin) NHWC, w: (kh,kw,Cin,Cout) HWIO -> (B,Ho,Wo,Cout)."""
    B, H, W, Cin = x.shape
    kh, kw, _, Cout = w.shape
    Ho = (H + 2 * padding - kh) // stride + 1
    Wo = (W + 2 * padding - kw) // stride + 1

    if kh == 1 and kw == 1 and padding == 0:
        # 1x1 fast path: no im2col at all.
        xs = x if stride == 1 else x[:, ::stride, ::stride, :]
        a = xs.reshape(B * Ho * Wo, Cin)
    else:
        xp = jnp.pad(x, ((0, 0), (padding, padding), (padding, padding),
                         (0, 0)))
        cols = [xp[:, i:i + stride * Ho:stride, j:j + stride * Wo:stride, :]
                for i in range(kh) for j in range(kw)]
        a = jnp.concatenate(cols, axis=-1).reshape(B * Ho * Wo, kh * kw * Cin)

    wmat = w.reshape(kh * kw * Cin, Cout)
    y = matmul_affine(a, wmat, scale, shift, residual,
                      activation=activation, out_dtype=out_dtype)
    return y.reshape(B, Ho, Wo, Cout)


@jax.jit
def maxpool_3x3_s2_p1(x):
    """3x3 stride-2 max pool, padding 1, via a row-tiled Pallas reduction."""
    B, H, W, C = x.shape
    Ho = (H - 1) // 2 + 1
    Wo = (W - 1) // 2 + 1
    neg = float(jnp.finfo(x.dtype).min)
    xp = jnp.pad(x, ((0, 0), (1, 1), (1, 1), (0, 0)), constant_values=neg)
    taps = [xp[:, i:i + 2 * Ho:2, j:j + 2 * Wo:2, :].reshape(B * Ho * Wo, C)
            for i in range(3) for j in range(3)]
    stacked = jnp.stack(taps, axis=0)                # (9, M, C)

    M = B * Ho * Wo
    RB = 512 if M >= 512 else _round_up(M, 8)
    Mp = _round_up(M, RB)
    if Mp != M:
        stacked = jnp.pad(stacked, ((0, 0), (0, Mp - M), (0, 0)),
                          constant_values=neg)

    out = pl.pallas_call(
        _maxpool_reduce_kernel,
        out_shape=jax.ShapeDtypeStruct((Mp, C), x.dtype),
        grid=(Mp // RB,),
        in_specs=[pl.BlockSpec((9, RB, C), lambda i: (0, i, 0))],
        out_specs=pl.BlockSpec((RB, C), lambda i: (i, 0)),
    )(stacked)
    return out[:M].reshape(B, Ho, Wo, C)


def upsample2x_nearest(x):
    x = jnp.repeat(x, 2, axis=1)
    x = jnp.repeat(x, 2, axis=2)
    return x


# ----------------------------------------------------------------------------
# Deterministic parameter construction
# ----------------------------------------------------------------------------

class ParamGen:
    def __init__(self, seed=0):
        self._key = jax.random.PRNGKey(seed)
        self._i = 0

    def _next(self):
        self._i += 1
        return jax.random.fold_in(self._key, self._i)

    def conv(self, kh, kw, cin, cout):
        std = (2.0 / (kh * kw * cin)) ** 0.5
        w = std * jax.random.normal(self._next(), (kh, kw, cin, cout),
                                    jnp.float32)
        return w.astype(jnp.bfloat16)      # MXU-ready weights

    def bn(self, c):
        # inference-mode BN folded to per-channel (scale, shift), kept in f32
        gamma = 1.0 + 0.1 * jax.random.normal(self._next(), (c,), jnp.float32)
        beta = 0.1 * jax.random.normal(self._next(), (c,), jnp.float32)
        mean = jnp.zeros((c,), jnp.float32)
        var = jnp.ones((c,), jnp.float32)
        scale = gamma / jnp.sqrt(var + 1e-5)
        shift = beta - mean * scale
        return scale, shift

    def bias(self, c):
        return 0.01 * jax.random.normal(self._next(), (c,), jnp.float32)


RESNET50_LAYERS = [  # (planes, num_blocks, first_stride)
    (64, 3, 1), (128, 4, 2), (256, 6, 2), (512, 3, 2)]
ENCODER_CHANNELS = (3, 64, 256, 512, 1024, 2048)
DECODER_CHANNELS = (256, 128, 64, 32, 16)


def build_resnet50_params(pg):
    p = {"conv1_w": pg.conv(7, 7, 3, 64), "bn1": pg.bn(64), "layers": []}
    cin = 64
    for planes, n_blocks, stride in RESNET50_LAYERS:
        blocks = []
        for b in range(n_blocks):
            s = stride if b == 0 else 1
            bp = {"conv1_w": pg.conv(1, 1, cin, planes), "bn1": pg.bn(planes),
                  "conv2_w": pg.conv(3, 3, planes, planes),
                  "bn2": pg.bn(planes),
                  "conv3_w": pg.conv(1, 1, planes, planes * 4),
                  "bn3": pg.bn(planes * 4)}
            if s != 1 or cin != planes * 4:
                bp["down_w"] = pg.conv(1, 1, cin, planes * 4)
                bp["down_bn"] = pg.bn(planes * 4)
            blocks.append(bp)
            cin = planes * 4
        p["layers"].append(blocks)
    return p


def _make_decoder_block(pg, in_ch, skip_ch, out_ch):
    c1_in = in_ch + skip_ch
    return {"conv1_w": pg.conv(3, 3, c1_in, out_ch), "bn1": pg.bn(out_ch),
            "conv2_w": pg.conv(3, 3, out_ch, out_ch), "bn2": pg.bn(out_ch)}


def build_unetpp_decoder_params(pg):
    enc = list(ENCODER_CHANNELS[1:])[::-1]          # [2048,1024,512,256,64]
    head = enc[0]
    in_channels = [head] + list(DECODER_CHANNELS[:-1])
    skip_channels = list(enc[1:]) + [0]
    out_channels = list(DECODER_CHANNELS)
    blocks = {}
    for layer_idx in range(len(in_channels) - 1):
        for depth_idx in range(layer_idx + 1):
            if depth_idx == 0:
                in_ch = in_channels[layer_idx]
                skip_ch = skip_channels[layer_idx] * (layer_idx + 1)
                out_ch = out_channels[layer_idx]
            else:
                out_ch = skip_channels[layer_idx]
                skip_ch = skip_channels[layer_idx] * (layer_idx + 1 - depth_idx)
                in_ch = skip_channels[layer_idx - 1]
            blocks[f"x_{depth_idx}_{layer_idx}"] = _make_decoder_block(
                pg, in_ch, skip_ch, out_ch)
    blocks[f"x_0_{len(in_channels) - 1}"] = _make_decoder_block(
        pg, in_channels[-1], 0, out_channels[-1])
    return blocks, len(in_channels) - 1


# ----------------------------------------------------------------------------
# Forward passes
# ----------------------------------------------------------------------------

def bottleneck_forward(x, bp, stride):
    if "down_w" in bp:
        identity = conv2d_affine(x, bp["down_w"], *bp["down_bn"],
                                 stride=stride, padding=0, activation="none")
    else:
        identity = x
    out = conv2d_affine(x, bp["conv1_w"], *bp["bn1"], activation="relu")
    out = conv2d_affine(out, bp["conv2_w"], *bp["bn2"], stride=stride,
                        padding=1, activation="relu")
    # conv3: BN affine + residual add + ReLU all fused in the matmul epilogue
    out = conv2d_affine(out, bp["conv3_w"], *bp["bn3"], residual=identity,
                        activation="relu")
    return out


def encoder_forward(x, ep):
    f0 = x
    f1 = conv2d_affine(x, ep["conv1_w"], *ep["bn1"], stride=2, padding=3,
                       activation="relu")
    x = maxpool_3x3_s2_p1(f1)
    feats = [f0, f1]
    for li, (planes, n_blocks, stride) in enumerate(RESNET50_LAYERS):
        for b, bp in enumerate(ep["layers"][li]):
            s = stride if b == 0 else 1
            x = bottleneck_forward(x, bp, s)
        feats.append(x)
    return feats


def decoder_block_forward(x, skip, bp):
    x = upsample2x_nearest(x)
    if skip is not None:
        x = jnp.concatenate([x, skip], axis=-1)
    x = conv2d_affine(x, bp["conv1_w"], *bp["bn1"], stride=1, padding=1,
                      activation="relu")
    x = conv2d_affine(x, bp["conv2_w"], *bp["bn2"], stride=1, padding=1,
                      activation="relu")
    return x


def decoder_forward(features, blocks, depth):
    feats = features[1:][::-1]
    dense = {}
    for layer_idx in range(depth):
        for depth_idx in range(depth - layer_idx):
            if layer_idx == 0:
                dense[f"x_{depth_idx}_{depth_idx}"] = decoder_block_forward(
                    feats[depth_idx], feats[depth_idx + 1],
                    blocks[f"x_{depth_idx}_{depth_idx}"])
            else:
                li = depth_idx + layer_idx
                cat = [dense[f"x_{idx}_{li}"]
                       for idx in range(depth_idx + 1, li + 1)]
                cat = jnp.concatenate(cat + [feats[li + 1]], axis=-1)
                dense[f"x_{depth_idx}_{li}"] = decoder_block_forward(
                    dense[f"x_{depth_idx}_{li - 1}"], cat,
                    blocks[f"x_{depth_idx}_{li}"])
    dense[f"x_0_{depth}"] = decoder_block_forward(
        dense[f"x_0_{depth - 1}"], None, blocks[f"x_0_{depth}"])
    return dense[f"x_0_{depth}"]


def network_forward(x_nchw, params):
    """Equivalent of Network.forward: UNet++(ResNet50) -> sigmoid mask."""
    x = jnp.transpose(x_nchw, (0, 2, 3, 1)).astype(jnp.bfloat16)  # NCHW->NHWC
    feats = encoder_forward(x, params["encoder"])
    dec = decoder_forward(feats, params["decoder_blocks"],
                          params["decoder_depth"])
    # segmentation head: 3x3 conv + bias + sigmoid fused in matmul epilogue
    y = conv2d_affine(dec, params["head_w"],
                      jnp.ones((1,), jnp.float32), params["head_b"],
                      stride=1, padding=1, activation="sigmoid",
                      out_dtype=jnp.float32)
    return jnp.transpose(y, (0, 3, 1, 2))                          # NHWC->NCHW


# ----------------------------------------------------------------------------
# Main
# ----------------------------------------------------------------------------

if __name__ == "__main__":
    pg = ParamGen(seed=0)
    dec_blocks, dec_depth = build_unetpp_decoder_params(pg)
    params = {
        "encoder": build_resnet50_params(pg),
        "decoder_blocks": dec_blocks,
        "decoder_depth": dec_depth,
        "head_w": pg.conv(3, 3, DECODER_CHANNELS[-1], 1),
        "head_b": pg.bias(1),
    }

    x = jax.random.normal(jax.random.PRNGKey(0), (2, 3, 64, 64), jnp.float32)
    y = network_forward(x, params)
    y = jax.block_until_ready(y)

    assert y.shape == (2, 1, 64, 64), y.shape
    assert bool(jnp.all(jnp.isfinite(y)))
    assert bool(jnp.all((y >= 0.0) & (y <= 1.0)))
    print("KERNEL_OK")
</pallas_src>

<mosaic_0001>
module attributes {stable_mosaic.version = 11 : i64} {
  func.func @_mm_affine_kernel(%arg0: i32, %arg1: i32, %arg2: i32, %arg3: memref<256x256xbf16, #tpu.memory_space<vmem>>, %arg4: memref<256x128xbf16, #tpu.memory_space<vmem>>, %arg5: memref<1x128xf32, #tpu.memory_space<vmem>>, %arg6: memref<1x128xf32, #tpu.memory_space<vmem>>, %arg7: memref<256x128xbf16, #tpu.memory_space<vmem>>, %arg8: memref<256x128xf32, #tpu.memory_space<vmem>>) attributes {dimension_semantics = [#tpu.dimension_semantics<parallel>, #tpu.dimension_semantics<parallel>, #tpu.dimension_semantics<arbitrary>], iteration_bounds = array<i64: 8, 1, 1>, scalar_prefetch = 0 : i64, scratch_operands = 1 : i64, tpu.core_type = #tpu.core_type<tc>, window_params = [{transform_indices = @transform_0, window_bounds = array<i64: 256, 256>}, {transform_indices = @transform_1, window_bounds = array<i64: 256, 128>}, {transform_indices = @transform_2, window_bounds = array<i64: 1, 128>}, {transform_indices = @transform_3, window_bounds = array<i64: 1, 128>}, {transform_indices = @transform_4, window_bounds = array<i64: 256, 128>}]} {
    %c0_i32 = arith.constant 0 : i32
    %0 = arith.cmpi eq, %arg2, %c0_i32 : i32
    %1 = arith.extui %0 : i1 to i32
    %c0_i32_0 = arith.constant 0 : i32
    %2 = arith.cmpi ne, %1, %c0_i32_0 : i32
    scf.if %2 {
      %cst_10 = arith.constant 0.000000e+00 : f32
      %12 = vector.broadcast %cst_10 : f32 to vector<256x128xf32>
      %c0_11 = arith.constant 0 : index
      %c0_12 = arith.constant 0 : index
      %13 = vector.load %arg8[%c0_11, %c0_12] : memref<256x128xf32, #tpu.memory_space<vmem>>, vector<256x128xf32>
      tpu.vector_store %arg8[%c0_11, %c0_12], %12 {strides = array<i32>} : memref<256x128xf32, #tpu.memory_space<vmem>>, vector<256x128xf32>,
    } else {
    }
    %c0 = arith.constant 0 : index
    %c0_1 = arith.constant 0 : index
    %3 = vector.load %arg8[%c0, %c0_1] : memref<256x128xf32, #tpu.memory_space<vmem>>, vector<256x128xf32>
    %c0_2 = arith.constant 0 : index
    %c0_3 = arith.constant 0 : index
    %4 = vector.load %arg3[%c0_2, %c0_3] : memref<256x256xbf16, #tpu.memory_space<vmem>>, vector<256x256xbf16>
    %c0_4 = arith.constant 0 : index
    %c0_5 = arith.constant 0 : index
    %5 = vector.load %arg4[%c0_4, %c0_5] : memref<256x128xbf16, #tpu.memory_space<vmem>>, vector<256x128xbf16>
    %cst = arith.constant dense<0.000000e+00> : vector<256x128xf32>
    %6 = tpu.matmul %4, %5, %cst {dimension_numbers = #tpu.dot_dimension_numbers<[1], [0], [0], [1], [0, 0, 1, 1], [], []>} : vector<256x256xbf16>, vector<256x128xbf16>, vector<256x128xf32> -> vector<256x128xf32>
    %7 = arith.addf %3, %6 : vector<256x128xf32>
    %c0_6 = arith.constant 0 : index
    %c0_7 = arith.constant 0 : index
    %8 = vector.load %arg8[%c0_6, %c0_7] : memref<256x128xf32, #tpu.memory_space<vmem>>, vector<256x128xf32>
    tpu.vector_store %arg8[%c0_6, %c0_7], %7 {strides = array<i32>} : memref<256x128xf32, #tpu.memory_space<vmem>>, vector<256x128xf32>,
    %c0_i32_8 = arith.constant 0 : i32
    %9 = arith.cmpi eq, %arg2, %c0_i32_8 : i32
    %10 = arith.extui %9 : i1 to i32
    %c0_i32_9 = arith.constant 0 : i32
    %11 = arith.cmpi ne, %10, %c0_i32_9 : i32
    scf.if %11 {
      %c0_10 = arith.constant 0 : index
      %c0_11 = arith.constant 0 : index
      %12 = vector.load %arg8[%c0_10, %c0_11] : memref<256x128xf32, #tpu.memory_space<vmem>>, vector<256x128xf32>
      %c0_12 = arith.constant 0 : index
      %c0_13 = arith.constant 0 : index
      %13 = vector.load %arg5[%c0_12, %c0_13] : memref<1x128xf32, #tpu.memory_space<vmem>>, vector<1x128xf32>
      %14 = vector.broadcast %13 : vector<1x128xf32> to vector<256x128xf32>
      %15 = arith.mulf %12, %14 : vector<256x128xf32>
      %c0_14 = arith.constant 0 : index
      %c0_15 = arith.constant 0 : index
      %16 = vector.load %arg6[%c0_14, %c0_15] : memref<1x128xf32, #tpu.memory_space<vmem>>, vector<1x128xf32>
      %17 = vector.broadcast %16 : vector<1x128xf32> to vector<256x128xf32>
      %18 = arith.addf %15, %17 : vector<256x128xf32>
      %cst_16 = arith.constant 0.000000e+00 : f32
      %19 = vector.broadcast %cst_16 : f32 to vector<256x128xf32>
      %20 = arith.maximumf %18, %19 : vector<256x128xf32>
      %21 = arith.truncf %20 : vector<256x128xf32> to vector<256x128xbf16>
      %c0_17 = arith.constant 0 : index
      %c0_18 = arith.constant 0 : index
      %22 = vector.load %arg7[%c0_17, %c0_18] : memref<256x128xbf16, #tpu.memory_space<vmem>>, vector<256x128xbf16>
      tpu.vector_store %arg7[%c0_17, %c0_18], %21 {strides = array<i32>} : memref<256x128xbf16, #tpu.memory_space<vmem>>, vector<256x128xbf16>,
    } else {
    }
    return
  }
  func.func @transform_0(%arg0: i32, %arg1: i32, %arg2: i32) -> (i32, i32) {
    %c0_i32 = arith.constant 0 : i32
    return %arg0, %arg2 : i32, i32
  }
  func.func @transform_1(%arg0: i32, %arg1: i32, %arg2: i32) -> (i32, i32) {
    %c0_i32 = arith.constant 0 : i32
    return %arg2, %arg1 : i32, i32
  }
  func.func @transform_2(%arg0: i32, %arg1: i32, %arg2: i32) -> (i32, i32) {
    %c0_i32 = arith.constant 0 : i32
    %c0_i32_0 = arith.constant 0 : i32
    return %c0_i32, %arg1 : i32, i32
  }
  func.func @transform_3(%arg0: i32, %arg1: i32, %arg2: i32) -> (i32, i32) {
    %c0_i32 = arith.constant 0 : i32
    %c0_i32_0 = arith.constant 0 : i32
    return %c0_i32, %arg1 : i32, i32
  }
  func.func @transform_4(%arg0: i32, %arg1: i32, %arg2: i32) -> (i32, i32) {
    %c0_i32 = arith.constant 0 : i32
    return %arg0, %arg1 : i32, i32
  }
}

</mosaic_0001>

<llo_original>
// kernel: conv2d_affine.1
$region0: #{conv2d_affine.1}
  #allocation0 [shape = 'u32[]', space=smem, size = 0x4, offset = 0x4, fixed_abs, tag = 'smem constant byte address 0x4 - core index']
  #allocation1 [shape = 'u32[144,128]{1,0:T(1,128)}', space=vmem, size = 0x12000, scoped, tag = 'internal scratch']
  #allocation2 [shape = 'f32[256,128]{1,0:T(8,128)}', space=vmem, size = 0x20000, scoped, tag = 'scratch operand']
  %s0 = inlined_call_operand.vmem [shape: bf16[2048,256], index: 0, kind: input, shape index: {}]
  %s1 = inlined_call_operand.vmem [shape: bf16[256,128], index: 1, kind: input, shape index: {}]
  %s2 = inlined_call_operand.vmem [shape: f32[1,128], index: 2, kind: input, shape index: {}]
  %s3 = inlined_call_operand.vmem [shape: f32[1,128], index: 3, kind: input, shape index: {}]
  %s4 = inlined_call_operand.hbm [shape: bf16[2048,128], index: 4, kind: output, shape index: {}]
  %s5 = sld [smem:[#allocation0]]
  $region57: #{conv2d_affine.1} parent=0
    _
  %s7 = ssub.s32 1, %s5
  %s8 = scalar_select 0, %s7, %s5
  $region1: #{conv2d_affine.1} parent=0
    #allocation3 [shape = 'u8[131072]{0}', space=vmem, size = 0x20000, scoped, tag = 'output window, operand 0']
    #allocation4 [shape = 's32[2]{0}', space=sflag, size = 0x8, scoped, tag = 'scoped memory for conv2d_affine.1']
    %9 = vsyncpa [#allocation4], 0
    %s10 = scalar_lea.sflag [#allocation4], 1
    %11 = vsyncpa %s10, 0
    loop: start=0, step=1, limit=10
    $region2: #{conv2d_affine.1} parent=1 // loop_pre_header
      _
    $region3: #{conv2d_affine.1} parent=1 // loop_header
      %s13 = sphi 0, %s17
      %p14 = scmp.ge.s32.totalorder %s13, 10
      %s20 = sphi 0, %s39
      %s21 = sphi 0, %s35
      %s22 = sphi 0, %s31
      %s23 = sphi 0, %s20
      %s24 = sphi 0, %s21
      %s25 = sphi 0, %s22
      %s26 = sphi 0, %s23
      %s27 = sphi 0, %s24
      %s28 = sphi 0, %s25
      %s44 = sphi 0, %s46
      %s47 = sphi 0, %s44
      %s48 = sphi 0, %s47
      %s64 = sphi 0, %s48
      %s72 = sphi 0, %s74
      %s75 = sphi 0, %s72
      %s76 = sphi 0, %s75
      %s92 = sphi 0, %s76
      %s98 = sphi 0, %s100
      %s101 = sphi 0, %s98
      %s102 = sphi 0, %s101
      %s118 = sphi 0, %s102
      %s124 = sphi 0, %s126
      %s127 = sphi 0, %s124
      %s128 = sphi 0, %s127
      %s144 = sphi 0, %s128
      %s152 = sphi 0, %s154
      %s155 = sphi 0, %s152
      %s156 = sphi 0, %s155
      %s172 = sphi 0, %s156
    $region4: #{conv2d_affine.1} parent=1 // loop_header_branch
      %16 = sbr.rel (%p14) target = $region8
    $region5: #{conv2d_affine.1} parent=1 // loop_body
      %s18 = ssub.s32 %s13, 1
      %s19 = ssub.s32 %s13, 2
      %s29 = sadd.s32 1, %s22
      %p30 = scmp.ge.s32.totalorder %s29, 1
      %s31 = scalar_select %p30, 0, %s29
      %s32 = sadd.s32 1, %s21
      %s33 = scalar_select %p30, %s32, %s21
      %p34 = scmp.ge.s32.totalorder %s33, 1
      %s35 = scalar_select %p34, 0, %s33
      %s36 = sadd.s32 1, %s20
      %s37 = scalar_select %p34, %s36, %s20
      %p38 = scmp.ge.s32.totalorder %s37, 8
      %s39 = scalar_select %p38, 0, %s37
      %s40 = ssub.s32 %s20, %s39
      %s41 = ssub.s32 %s22, %s31
      %s42 = sor.u32 %s40, %s41
      %p43 = scmp.eq.s32.totalorder %s42, 0
      %s45 = sadd.s32 %s44, 1
      %s46 = scalar_select %p43, %s44, %s45
      %p49 = pneg %p43
      %p50 = scmp.eq.s32.totalorder %s13, 7
      %p51 = por %p49, %p50
      %p52 = scmp.ne.s32.totalorder %s44, %s47
      %p53 = scmp.eq.s32.totalorder %s13, 0
      %p54 = por %p52, %p53
      %p55 = scmp.ne.s32.totalorder %s44, %s47
      %p56 = scmp.eq.s32.totalorder %s18, 7
      %p57 = por %p55, %p56
      %p58 = scmp.ne.s32.totalorder %s47, %s48
      %p59 = scmp.eq.s32.totalorder %s18, 0
      %p60 = por %p58, %p59
      %p61 = scmp.ne.s32.totalorder %s47, %s48
      %p62 = scmp.eq.s32.totalorder %s19, 7
      %p63 = por %p61, %p62
      %p65 = scmp.ne.s32.totalorder %s48, %s64
      %p66 = scmp.eq.s32.totalorder %s19, 0
      %p67 = por %p65, %p66
      %s68 = ssub.s32 %s22, %s31
      %s69 = ssub.s32 %s21, %s35
      %s70 = sor.u32 %s68, %s69
      %p71 = scmp.eq.s32.totalorder %s70, 0
      %s73 = sadd.s32 %s72, 1
      %s74 = scalar_select %p71, %s72, %s73
      %p77 = pneg %p71
      %p78 = scmp.eq.s32.totalorder %s13, 7
      %p79 = por %p77, %p78
      %p80 = scmp.ne.s32.totalorder %s72, %s75
      %p81 = scmp.eq.s32.totalorder %s13, 0
      %p82 = por %p80, %p81
      %p83 = scmp.ne.s32.totalorder %s72, %s75
      %p84 = scmp.eq.s32.totalorder %s18, 7
      %p85 = por %p83, %p84
      %p86 = scmp.ne.s32.totalorder %s75, %s76
      %p87 = scmp.eq.s32.totalorder %s18, 0
      %p88 = por %p86, %p87
      %p89 = scmp.ne.s32.totalorder %s75, %s76
      %p90 = scmp.eq.s32.totalorder %s19, 7
      %p91 = por %p89, %p90
      %p93 = scmp.ne.s32.totalorder %s76, %s92
      %p94 = scmp.eq.s32.totalorder %s19, 0
      %p95 = por %p93, %p94
      %s96 = ssub.s32 %s21, %s35
      %p97 = scmp.eq.s32.totalorder %s96, 0
      %s99 = sadd.s32 %s98, 1
      %s100 = scalar_select %p97, %s98, %s99
      %p103 = pneg %p97
      %p104 = scmp.eq.s32.totalorder %s13, 7
      %p105 = por %p103, %p104
      %p106 = scmp.ne.s32.totalorder %s98, %s101
      %p107 = scmp.eq.s32.totalorder %s13, 0
      %p108 = por %p106, %p107
      %p109 = scmp.ne.s32.totalorder %s98, %s101
      %p110 = scmp.eq.s32.totalorder %s18, 7
      %p111 = por %p109, %p110
      %p112 = scmp.ne.s32.totalorder %s101, %s102
      %p113 = scmp.eq.s32.totalorder %s18, 0
      %p114 = por %p112, %p113
      %p115 = scmp.ne.s32.totalorder %s101, %s102
      %p116 = scmp.eq.s32.totalorder %s19, 7
      %p117 = por %p115, %p116
      %p119 = scmp.ne.s32.totalorder %s102, %s118
      %p120 = scmp.eq.s32.totalorder %s19, 0
      %p121 = por %p119, %p120
      %s122 = ssub.s32 %s21, %s35
      %p123 = scmp.eq.s32.totalorder %s122, 0
      %s125 = sadd.s32 %s124, 1
      %s126 = scalar_select %p123, %s124, %s125
      %p129 = pneg %p123
      %p130 = scmp.eq.s32.totalorder %s13, 7
      %p131 = por %p129, %p130
      %p132 = scmp.ne.s32.totalorder %s124, %s127
      %p133 = scmp.eq.s32.totalorder %s13, 0
      %p134 = por %p132, %p133
      %p135 = scmp.ne.s32.totalorder %s124, %s127
      %p136 = scmp.eq.s32.totalorder %s18, 7
      %p137 = por %p135, %p136
      %p138 = scmp.ne.s32.totalorder %s127, %s128
      %p139 = scmp.eq.s32.totalorder %s18, 0
      %p140 = por %p138, %p139
      %p141 = scmp.ne.s32.totalorder %s127, %s128
      %p142 = scmp.eq.s32.totalorder %s19, 7
      %p143 = por %p141, %p142
      %p145 = scmp.ne.s32.totalorder %s128, %s144
      %p146 = scmp.eq.s32.totalorder %s19, 0
      %p147 = por %p145, %p146
      %s148 = ssub.s32 %s20, %s39
      %s149 = ssub.s32 %s21, %s35
      %s150 = sor.u32 %s148, %s149
      %p151 = scmp.eq.s32.totalorder %s150, 0
      %s153 = sadd.s32 %s152, 1
      %s154 = scalar_select %p151, %s152, %s153
      %p157 = pneg %p151
      %p158 = scmp.eq.s32.totalorder %s13, 7
      %p159 = por %p157, %p158
      %p160 = scmp.ne.s32.totalorder %s152, %s155
      %p161 = scmp.eq.s32.totalorder %s13, 0
      %p162 = por %p160, %p161
      %p163 = scmp.ne.s32.totalorder %s152, %s155
      %p164 = scmp.eq.s32.totalorder %s18, 7
      %p165 = por %p163, %p164
      %p166 = scmp.ne.s32.totalorder %s155, %s156
      %p167 = scmp.eq.s32.totalorder %s18, 0
      %p168 = por %p166, %p167
      %p169 = scmp.ne.s32.totalorder %s155, %s156
      %p170 = scmp.eq.s32.totalorder %s19, 7
      %p171 = por %p169, %p170
      %p173 = scmp.ne.s32.totalorder %s156, %s172
      %p174 = scmp.eq.s32.totalorder %s19, 0
      %p175 = por %p173, %p174
      %p176 = scmp.le.s32.totalorder 1, %s13
      %p177 = scmp.lt.s32.totalorder %s13, 9
      %p178 = pnand %p176, %p177
      %p179 = pneg %p178
      // Predicated region
      $region9: #{conv2d_affine.1} parent=5 // pred_check
        _
      $region10: #{conv2d_affine.1} parent=5 // pred_check_branch
        %181 = sbr.rel (%p178) target = $region12
      $region11: #{conv2d_affine.1} parent=5 // pred_region
        %s182 = ssub.s32 %s13, 1
        // Predicated region
        $region13: #{conv2d_affine.1} parent=11 // pred_check
          %p183 = pneg %p88
        $region14: #{conv2d_affine.1} parent=11 // pred_check_branch
          %185 = sbr.rel (%p183) target = $region16
        $region15: #{conv2d_affine.1} parent=11 // pred_region
          %s186 = smul.u32 32, %s25
          %p187 = scmp.lt.s32.totalorder %s186, 31
          %s188 = scalar_select %p187, %s186, 31
          %p189 = scmp.lt.s32.totalorder %s24, 0
          %s190 = scalar_select %p189, %s24, 0
          %s191 = sadd.s32 %s190, %s188
          %s192 = smul.addr %s191, 4
          %s193 = scalar_lea.vmem %s1, %s192
          %s194 = smul.u32 32, %s25
        $region16: #{conv2d_affine.1} parent=11 // pred_fallthru
          _
        // Predicated region
        $region17: #{conv2d_affine.1} parent=11 // pred_check
          %p195 = pneg %p114
        $region18: #{conv2d_affine.1} parent=11 // pred_check_branch
          %197 = sbr.rel (%p195) target = $region20
        $region19: #{conv2d_affine.1} parent=11 // pred_region
          %p198 = scmp.lt.s32.totalorder %s24, 0
          %s199 = scalar_select %p198, %s24, 0
          %s200 = scalar_lea.vmem %s2, %s199
        $region20: #{conv2d_affine.1} parent=11 // pred_fallthru
          _
        // Predicated region
        $region21: #{conv2d_affine.1} parent=11 // pred_check
          %p201 = pneg %p140
        $region22: #{conv2d_affine.1} parent=11 // pred_check_branch
          %203 = sbr.rel (%p201) target = $region24
        $region23: #{conv2d_affine.1} parent=11 // pred_region
          %p204 = scmp.lt.s32.totalorder %s24, 0
          %s205 = scalar_select %p204, %s24, 0
          %s206 = scalar_lea.vmem %s3, %s205
        $region24: #{conv2d_affine.1} parent=11 // pred_fallthru
          _
      $region12: #{conv2d_affine.1} parent=5 // pred_fallthru
        _
      %p207 = scmp.lt.s32.totalorder %s13, 8
      // Predicated region
      $region25: #{conv2d_affine.1} parent=5 // pred_check
        %p208 = pneg %p207
      $region26: #{conv2d_affine.1} parent=5 // pred_check_branch
        %210 = sbr.rel (%p208) target = $region28
      $region27: #{conv2d_affine.1} parent=5 // pred_region
        // Predicated region
        $region29: #{conv2d_affine.1} parent=27 // pred_check
          %p211 = pneg %p54
        $region30: #{conv2d_affine.1} parent=27 // pred_check_branch
          %213 = sbr.rel (%p211) target = $region32
        $region31: #{conv2d_affine.1} parent=27 // pred_region
          %s214 = smul.u32 32, %s20
          %s215 = smul.u32 2, %s22
          %p216 = scmp.lt.s32.totalorder %s214, 255
          %s217 = scalar_select %p216, %s214, 255
          %p218 = scmp.lt.s32.totalorder %s215, 1
          %s219 = scalar_select %p218, %s215, 1
          %s220 = smul.addr %s217, 2
          %s221 = sadd.s32 %s219, %s220
          %s222 = smul.addr %s221, 4
          %s223 = scalar_lea.vmem %s0, %s222
          %s224 = smul.u32 32, %s20
          %s225 = smul.u32 2, %s22
        $region32: #{conv2d_affine.1} parent=27 // pred_fallthru
          _
      $region28: #{conv2d_affine.1} parent=5 // pred_fallthru
        _
      %p226 = scmp.le.s32.totalorder 1, %s13
      %p227 = scmp.lt.s32.totalorder %s13, 9
      %p228 = pnand %p226, %p227
      %p229 = pneg %p228
      // Predicated region
      $region33: #{conv2d_affine.1} parent=5 // pred_check
        _
      $region34: #{conv2d_affine.1} parent=5 // pred_check_branch
        %231 = sbr.rel (%p228) target = $region36
      $region35: #{conv2d_affine.1} parent=5 // pred_region
        %s232 = ssub.s32 %s13, 1
        %s233 = smul.u32 32, %s23
        %s234 = smul.u32 2, %s25
        %p235 = scmp.lt.s32.totalorder %s233, 255
        %s236 = scalar_select %p235, %s233, 255
        %p237 = scmp.lt.s32.totalorder %s234, 1
        %s238 = scalar_select %p237, %s234, 1
        %s239 = smul.addr %s236, 2
        %s240 = sadd.s32 %s238, %s239
        %s241 = smul.addr %s240, 4
        %s242 = scalar_lea.vmem %s0, %s241
        %p243 = pneg %p60
        %p244 = pneg %p57
        %s245 = smul.u32 32, %s25
        %p246 = scmp.lt.s32.totalorder %s245, 31
        %s247 = scalar_select %p246, %s245, 31
        %p248 = scmp.lt.s32.totalorder %s24, 0
        %s249 = scalar_select %p248, %s24, 0
        %s250 = sadd.s32 %s249, %s247
        %s251 = smul.addr %s250, 4
        %s252 = scalar_lea.vmem %s1, %s251
        %p253 = pneg %p88
        %p254 = pneg %p85
        %p255 = scmp.lt.s32.totalorder %s24, 0
        %s256 = scalar_select %p255, %s24, 0
        %s257 = scalar_lea.vmem %s2, %s256
        %p258 = pneg %p114
        %p259 = pneg %p111
        %p260 = scmp.lt.s32.totalorder %s24, 0
        %s261 = scalar_select %p260, %s24, 0
        %s262 = scalar_lea.vmem %s3, %s261
        %p263 = pneg %p140
        %p264 = pneg %p137
        %p265 = pneg %p168
        %p266 = pneg %p165
        %s267 = sand.u32 %s155, 1
        %s268 = scalar_lea.sflag [#allocation4], %s267
        %s269 = sand.u32 %s155, 1
        %s270 = smul.addr %s269, 128
        %s271 = scalar_lea.vmem [#allocation3], %s270
        %s272 = smul.u32 32, %s23
        %s273 = smul.u32 2, %s25
        %p274 = scmp.lt.s32.totalorder %s272, 255
        %s275 = scalar_select %p274, %s272, 255
        %p276 = scmp.lt.s32.totalorder %s273, 1
        %s277 = scalar_select %p276, %s273, 1
        %s278 = smul.addr %s275, 2
        %s279 = sadd.s32 %s277, %s278
        %s280 = smul.addr %s279, 4
        %s281 = scalar_lea.vmem %s0, %s280
        %s282 = smul.u32 32, %s23
        %s283 = smul.u32 2, %s25
        %s284 = smul.u32 32, %s25
        %p285 = scmp.lt.s32.totalorder %s284, 31
        %s286 = scalar_select %p285, %s284, 31
        %p287 = scmp.lt.s32.totalorder %s24, 0
        %s288 = scalar_select %p287, %s24, 0
        %s289 = sadd.s32 %s288, %s286
        %s290 = smul.addr %s289, 4
        %s291 = scalar_lea.vmem %s1, %s290
        %s292 = smul.u32 32, %s25
        %p293 = scmp.lt.s32.totalorder %s24, 0
        %s294 = scalar_select %p293, %s24, 0
        %s295 = scalar_lea.vmem %s2, %s294
        %p296 = scmp.lt.s32.totalorder %s24, 0
        %s297 = scalar_select %p296, %s24, 0
        %s298 = scalar_lea.vmem %s3, %s297
        %s299 = smul.u32 32, %s23
        %p301 = scmp.eq.s32.totalorder %s25, 0
        // Predicated region
        $region37: #{conv2d_affine.1} parent=35 // pred_check
          %p302 = pneg %p301
        $region38: #{conv2d_affine.1} parent=35 // pred_check_branch
          %304 = sbr.rel (%p302) target = $region40
        $region39: #{conv2d_affine.1} parent=35 // pred_region
          %305 = vst [vmem:[#allocation2] sm:$0xff] 0.0
          %306 = vst [vmem:[#allocation2 + $0x8] sm:$0xff] 0.0
          %307 = vst [vmem:[#allocation2 + $0x10] sm:$0xff] 0.0
          %308 = vst [vmem:[#allocation2 + $0x18] sm:$0xff] 0.0
          %309 = vst [vmem:[#allocation2 + $0x20] sm:$0xff] 0.0
          %310 = vst [vmem:[#allocation2 + $0x28] sm:$0xff] 0.0
          %311 = vst [vmem:[#allocation2 + $0x30] sm:$0xff] 0.0
          %312 = vst [vmem:[#allocation2 + $0x38] sm:$0xff] 0.0
          %313 = vst [vmem:[#allocation2 + $0x40] sm:$0xff] 0.0
          %314 = vst [vmem:[#allocation2 + $0x48] sm:$0xff] 0.0
          %315 = vst [vmem:[#allocation2 + $0x50] sm:$0xff] 0.0
          %316 = vst [vmem:[#allocation2 + $0x58] sm:$0xff] 0.0
          %317 = vst [vmem:[#allocation2 + $0x60] sm:$0xff] 0.0
          %318 = vst [vmem:[#allocation2 + $0x68] sm:$0xff] 0.0
          %319 = vst [vmem:[#allocation2 + $0x70] sm:$0xff] 0.0
          %320 = vst [vmem:[#allocation2 + $0x78] sm:$0xff] 0.0
          %321 = vst [vmem:[#allocation2 + $0x80] sm:$0xff] 0.0
          %322 = vst [vmem:[#allocation2 + $0x88] sm:$0xff] 0.0
          %323 = vst [vmem:[#allocation2 + $0x90] sm:$0xff] 0.0
          %324 = vst [vmem:[#allocation2 + $0x98] sm:$0xff] 0.0
          %325 = vst [vmem:[#allocation2 + $0xa0] sm:$0xff] 0.0
          %326 = vst [vmem:[#allocation2 + $0xa8] sm:$0xff] 0.0
          %327 = vst [vmem:[#allocation2 + $0xb0] sm:$0xff] 0.0
          %328 = vst [vmem:[#allocation2 + $0xb8] sm:$0xff] 0.0
          %329 = vst [vmem:[#allocation2 + $0xc0] sm:$0xff] 0.0
          %330 = vst [vmem:[#allocation2 + $0xc8] sm:$0xff] 0.0
          %331 = vst [vmem:[#allocation2 + $0xd0] sm:$0xff] 0.0
          %332 = vst [vmem:[#allocation2 + $0xd8] sm:$0xff] 0.0
          %333 = vst [vmem:[#allocation2 + $0xe0] sm:$0xff] 0.0
          %334 = vst [vmem:[#allocation2 + $0xe8] sm:$0xff] 0.0
          %335 = vst [vmem:[#allocation2 + $0xf0] sm:$0xff] 0.0
          %336 = vst [vmem:[#allocation2 + $0xf8] sm:$0xff] 0.0
        $region40: #{conv2d_affine.1} parent=35 // pred_fallthru
          _
        %v337 = vld [vmem:[#allocation2] sm:$0xff]
        %v338 = vld [vmem:[#allocation2 + $0x8] sm:$0xff]
        %v339 = vld [vmem:[#allocation2 + $0x10] sm:$0xff]
        %v340 = vld [vmem:[#allocation2 + $0x18] sm:$0xff]
        %v341 = vld [vmem:[#allocation2 + $0x20] sm:$0xff]
        %v342 = vld [vmem:[#allocation2 + $0x28] sm:$0xff]
        %v343 = vld [vmem:[#allocation2 + $0x30] sm:$0xff]
        %v344 = vld [vmem:[#allocation2 + $0x38] sm:$0xff]
        %v345 = vld [vmem:[#allocation2 + $0x40] sm:$0xff]
        %v346 = vld [vmem:[#allocation2 + $0x48] sm:$0xff]
        %v347 = vld [vmem:[#allocation2 + $0x50] sm:$0xff]
        %v348 = vld [vmem:[#allocation2 + $0x58] sm:$0xff]
        %v349 = vld [vmem:[#allocation2 + $0x60] sm:$0xff]
        %v350 = vld [vmem:[#allocation2 + $0x68] sm:$0xff]
        %v351 = vld [vmem:[#allocation2 + $0x70] sm:$0xff]
        %v352 = vld [vmem:[#allocation2 + $0x78] sm:$0xff]
        %v353 = vld [vmem:[#allocation2 + $0x80] sm:$0xff]
        %v354 = vld [vmem:[#allocation2 + $0x88] sm:$0xff]
        %v355 = vld [vmem:[#allocation2 + $0x90] sm:$0xff]
        %v356 = vld [vmem:[#allocation2 + $0x98] sm:$0xff]
        %v357 = vld [vmem:[#allocation2 + $0xa0] sm:$0xff]
        %v358 = vld [vmem:[#allocation2 + $0xa8] sm:$0xff]
        %v359 = vld [vmem:[#allocation2 + $0xb0] sm:$0xff]
        %v360 = vld [vmem:[#allocation2 + $0xb8] sm:$0xff]
        %v361 = vld [vmem:[#allocation2 + $0xc0] sm:$0xff]
        %v362 = vld [vmem:[#allocation2 + $0xc8] sm:$0xff]
        %v363 = vld [vmem:[#allocation2 + $0xd0] sm:$0xff]
        %v364 = vld [vmem:[#allocation2 + $0xd8] sm:$0xff]
        %v365 = vld [vmem:[#allocation2 + $0xe0] sm:$0xff]
        %v366 = vld [vmem:[#allocation2 + $0xe8] sm:$0xff]
        %v367 = vld [vmem:[#allocation2 + $0xf0] sm:$0xff]
        %v368 = vld [vmem:[#allocation2 + $0xf8] sm:$0xff]
        %v369 = vld [vmem:[%s281] sm:$0xff]
        %v370 = vld [vmem:[%s281 + $0x8] sm:$0xff]
        %v371 = vld [vmem:[%s281 + $0x10] sm:$0xff]
        %v372 = vld [vmem:[%s281 + $0x18] sm:$0xff]
        %v373 = vld [vmem:[%s281 + $0x20] sm:$0xff]
        %v374 = vld [vmem:[%s281 + $0x28] sm:$0xff]
        %v375 = vld [vmem:[%s281 + $0x30] sm:$0xff]
        %v376 = vld [vmem:[%s281 + $0x38] sm:$0xff]
        %v377 = vld [vmem:[%s281 + $0x40] sm:$0xff]
        %v378 = vld [vmem:[%s281 + $0x48] sm:$0xff]
        %v379 = vld [vmem:[%s281 + $0x50] sm:$0xff]
        %v380 = vld [vmem:[%s281 + $0x58] sm:$0xff]
        %v381 = vld [vmem:[%s281 + $0x60] sm:$0xff]
        %v382 = vld [vmem:[%s281 + $0x68] sm:$0xff]
        %v383 = vld [vmem:[%s281 + $0x70] sm:$0xff]
        %v384 = vld [vmem:[%s281 + $0x78] sm:$0xff]
        %v385 = vld [vmem:[%s281 + $0x80] sm:$0xff]
        %v386 = vld [vmem:[%s281 + $0x88] sm:$0xff]
        %v387 = vld [vmem:[%s281 + $0x90] sm:$0xff]
        %v388 = vld [vmem:[%s281 + $0x98] sm:$0xff]
        %v389 = vld [vmem:[%s281 + $0xa0] sm:$0xff]
        %v390 = vld [vmem:[%s281 + $0xa8] sm:$0xff]
        %v391 = vld [vmem:[%s281 + $0xb0] sm:$0xff]
        %v392 = vld [vmem:[%s281 + $0xb8] sm:$0xff]
        %v393 = vld [vmem:[%s281 + $0xc0] sm:$0xff]
        %v394 = vld [vmem:[%s281 + $0xc8] sm:$0xff]
        %v395 = vld [vmem:[%s281 + $0xd0] sm:$0xff]
        %v396 = vld [vmem:[%s281 + $0xd8] sm:$0xff]
        %v397 = vld [vmem:[%s281 + $0xe0] sm:$0xff]
        %v398 = vld [vmem:[%s281 + $0xe8] sm:$0xff]
        %v399 = vld [vmem:[%s281 + $0xf0] sm:$0xff]
        %v400 = vld [vmem:[%s281 + $0xf8] sm:$0xff]
        %v401 = vld [vmem:[%s291] sm:$0xf]
        %v402 = vld [vmem:[%s291 + $0x4] sm:$0xf]
        %v403 = vld [vmem:[%s291 + $0x8] sm:$0xf]
        %v404 = vld [vmem:[%s291 + $0xc] sm:$0xf]
        %v405 = vld [vmem:[%s291 + $0x10] sm:$0xf]
        %v406 = vld [vmem:[%s291 + $0x14] sm:$0xf]
        %v407 = vld [vmem:[%s291 + $0x18] sm:$0xf]
        %v408 = vld [vmem:[%s291 + $0x1c] sm:$0xf]
        %v409 = vld [vmem:[%s291 + $0x20] sm:$0xf]
        %v410 = vld [vmem:[%s291 + $0x24] sm:$0xf]
        %v411 = vld [vmem:[%s291 + $0x28] sm:$0xf]
        %v412 = vld [vmem:[%s291 + $0x2c] sm:$0xf]
        %v413 = vld [vmem:[%s291 + $0x30] sm:$0xf]
        %v414 = vld [vmem:[%s291 + $0x34] sm:$0xf]
        %v415 = vld [vmem:[%s291 + $0x38] sm:$0xf]
        %v416 = vld [vmem:[%s291 + $0x3c] sm:$0xf]
        %v417 = vld [vmem:[%s291 + $0x40] sm:$0xf]
        %v418 = vld [vmem:[%s291 + $0x44] sm:$0xf]
        %v419 = vld [vmem:[%s291 + $0x48] sm:$0xf]
        %v420 = vld [vmem:[%s291 + $0x4c] sm:$0xf]
        %v421 = vld [vmem:[%s291 + $0x50] sm:$0xf]
        %v422 = vld [vmem:[%s291 + $0x54] sm:$0xf]
        %v423 = vld [vmem:[%s291 + $0x58] sm:$0xf]
        %v424 = vld [vmem:[%s291 + $0x5c] sm:$0xf]
        %v425 = vld [vmem:[%s291 + $0x60] sm:$0xf]
        %v426 = vld [vmem:[%s291 + $0x64] sm:$0xf]
        %v427 = vld [vmem:[%s291 + $0x68] sm:$0xf]
        %v428 = vld [vmem:[%s291 + $0x6c] sm:$0xf]
        %v429 = vld [vmem:[%s291 + $0x70] sm:$0xf]
        %v430 = vld [vmem:[%s291 + $0x74] sm:$0xf]
        %v431 = vld [vmem:[%s291 + $0x78] sm:$0xf]
        %v432 = vld [vmem:[%s291 + $0x7c] sm:$0xf]
        %v465 = vunpack.c.l.b16 %v369
        %v466 = vunpack.c.h.b16 %v369
        %v467 = vunpack.c.l.b16 %v370
        %v468 = vunpack.c.h.b16 %v370
        %v469 = vunpack.c.l.b16 %v371
        %v470 = vunpack.c.h.b16 %v371
        %v471 = vunpack.c.l.b16 %v372
        %v472 = vunpack.c.h.b16 %v372
        %v473 = vunpack.c.l.b16 %v373
        %v474 = vunpack.c.h.b16 %v373
        %v475 = vunpack.c.l.b16 %v374
        %v476 = vunpack.c.h.b16 %v374
        %v477 = vunpack.c.l.b16 %v375
        %v478 = vunpack.c.h.b16 %v375
        %v479 = vunpack.c.l.b16 %v376
        %v480 = vunpack.c.h.b16 %v376
        %v481 = vunpack.c.l.b16 %v377
        %v482 = vunpack.c.h.b16 %v377
        %v483 = vunpack.c.l.b16 %v378
        %v484 = vunpack.c.h.b16 %v378
        %v485 = vunpack.c.l.b16 %v379
        %v486 = vunpack.c.h.b16 %v379
        %v487 = vunpack.c.l.b16 %v380
        %v488 = vunpack.c.h.b16 %v380
        %v489 = vunpack.c.l.b16 %v381
        %v490 = vunpack.c.h.b16 %v381
        %v491 = vunpack.c.l.b16 %v382
        %v492 = vunpack.c.h.b16 %v382
        %v493 = vunpack.c.l.b16 %v383
        %v494 = vunpack.c.h.b16 %v383
        %v495 = vunpack.c.l.b16 %v384
        %v496 = vunpack.c.h.b16 %v384
        %v497 = vunpack.c.l.b16 %v385
        %v498 = vunpack.c.h.b16 %v385
        %v499 = vunpack.c.l.b16 %v386
        %v500 = vunpack.c.h.b16 %v386
        %v501 = vunpack.c.l.b16 %v387
        %v502 = vunpack.c.h.b16 %v387
        %v503 = vunpack.c.l.b16 %v388
        %v504 = vunpack.c.h.b16 %v388
        %v505 = vunpack.c.l.b16 %v389
        %v506 = vunpack.c.h.b16 %v389
        %v507 = vunpack.c.l.b16 %v390
        %v508 = vunpack.c.h.b16 %v390
        %v509 = vunpack.c.l.b16 %v391
        %v510 = vunpack.c.h.b16 %v391
        %v511 = vunpack.c.l.b16 %v392
        %v512 = vunpack.c.h.b16 %v392
        %v513 = vunpack.c.l.b16 %v393
        %v514 = vunpack.c.h.b16 %v393
        %v515 = vunpack.c.l.b16 %v394
        %v516 = vunpack.c.h.b16 %v394
        %v517 = vunpack.c.l.b16 %v395
        %v518 = vunpack.c.h.b16 %v395
        %v519 = vunpack.c.l.b16 %v396
        %v520 = vunpack.c.h.b16 %v396
        %v521 = vunpack.c.l.b16 %v397
        %v522 = vunpack.c.h.b16 %v397
        %v523 = vunpack.c.l.b16 %v398
        %v524 = vunpack.c.h.b16 %v398
        %v525 = vunpack.c.l.b16 %v399
        %v526 = vunpack.c.h.b16 %v399
        %v527 = vunpack.c.l.b16 %v400
        %v528 = vunpack.c.h.b16 %v400
        %v529 = vpack.c.b16 %v467, %v465
        %v530 = vpack.c.b16 %v468, %v466
        %v531 = vpack.c.b16 %v471, %v469
        %v532 = vpack.c.b16 %v472, %v470
        %v533 = vpack.c.b16 %v475, %v473
        %v534 = vpack.c.b16 %v476, %v474
        %v535 = vpack.c.b16 %v479, %v477
        %v536 = vpack.c.b16 %v480, %v478
        %v537 = vpack.c.b16 %v483, %v481
        %v538 = vpack.c.b16 %v484, %v482
        %v539 = vpack.c.b16 %v487, %v485
        %v540 = vpack.c.b16 %v488, %v486
        %v541 = vpack.c.b16 %v491, %v489
        %v542 = vpack.c.b16 %v492, %v490
        %v543 = vpack.c.b16 %v495, %v493
        %v544 = vpack.c.b16 %v496, %v494
        %v545 = vpack.c.b16 %v499, %v497
        %v546 = vpack.c.b16 %v500, %v498
        %v547 = vpack.c.b16 %v503, %v501
        %v548 = vpack.c.b16 %v504, %v502
        %v549 = vpack.c.b16 %v507, %v505
        %v550 = vpack.c.b16 %v508, %v506
        %v551 = vpack.c.b16 %v511, %v509
        %v552 = vpack.c.b16 %v512, %v510
        %v553 = vpack.c.b16 %v515, %v513
        %v554 = vpack.c.b16 %v516, %v514
        %v555 = vpack.c.b16 %v519, %v517
        %v556 = vpack.c.b16 %v520, %v518
        %v557 = vpack.c.b16 %v523, %v521
        %v558 = vpack.c.b16 %v524, %v522
        %v559 = vpack.c.b16 %v527, %v525
        %v560 = vpack.c.b16 %v528, %v526
        %v625 = vunpack.c.l.b16 %v401
        %v626 = vunpack.c.l.b16 %v402
        %v627 = vunpack.c.l.b16 %v403
        %v628 = vunpack.c.l.b16 %v404
        %v629 = vunpack.c.l.b16 %v405
        %v630 = vunpack.c.l.b16 %v406
        %v631 = vunpack.c.l.b16 %v407
        %v632 = vunpack.c.l.b16 %v408
        %v633 = vunpack.c.l.b16 %v409
        %v634 = vunpack.c.l.b16 %v410
        %v635 = vunpack.c.l.b16 %v411
        %v636 = vunpack.c.l.b16 %v412
        %v637 = vunpack.c.l.b16 %v413
        %v638 = vunpack.c.l.b16 %v414
        %v639 = vunpack.c.l.b16 %v415
        %v640 = vunpack.c.l.b16 %v416
        %v641 = vunpack.c.l.b16 %v417
        %v642 = vunpack.c.l.b16 %v418
        %v643 = vunpack.c.l.b16 %v419
        %v644 = vunpack.c.l.b16 %v420
        %v645 = vunpack.c.l.b16 %v421
        %v646 = vunpack.c.l.b16 %v422
        %v647 = vunpack.c.l.b16 %v423
        %v648 = vunpack.c.l.b16 %v424
        %v649 = vunpack.c.l.b16 %v425
        %v650 = vunpack.c.l.b16 %v426
        %v651 = vunpack.c.l.b16 %v427
        %v652 = vunpack.c.l.b16 %v428
        %v653 = vunpack.c.l.b16 %v429
        %v654 = vunpack.c.l.b16 %v430
        %v655 = vunpack.c.l.b16 %v431
        %v656 = vunpack.c.l.b16 %v432
        %v657 = vpack.c.b16 %v626, %v625
        %v658 = vpack.c.b16 %v628, %v627
        %v659 = vpack.c.b16 %v630, %v629
        %v660 = vpack.c.b16 %v632, %v631
        %v661 = vpack.c.b16 %v634, %v633
        %v662 = vpack.c.b16 %v636, %v635
        %v663 = vpack.c.b16 %v638, %v637
        %v664 = vpack.c.b16 %v640, %v639
        %v665 = vpack.c.b16 %v642, %v641
        %v666 = vpack.c.b16 %v644, %v643
        %v667 = vpack.c.b16 %v646, %v645
        %v668 = vpack.c.b16 %v648, %v647
        %v669 = vpack.c.b16 %v650, %v649
        %v670 = vpack.c.b16 %v652, %v651
        %v671 = vpack.c.b16 %v654, %v653
        %v672 = vpack.c.b16 %v656, %v655
        %689 = vmatprep.subr.bf16.mxu0 0
        %690 = vmatpush1.bf16.msra.mxu0 %v657
        %691 = vmatprep.subr.bf16.mxu0 0
        %692 = vmatpush1.bf16.msra.mxu0 %v658
        %693 = vmatprep.subr.bf16.mxu0 0
        %694 = vmatpush1.bf16.msra.mxu0 %v659
        %695 = vmatprep.subr.bf16.mxu0 0
        %696 = vmatpush1.bf16.msra.mxu0 %v660
        %697 = vmatprep.subr.bf16.mxu0 0
        %698 = vmatpush1.bf16.msra.mxu0 %v661
        %699 = vmatprep.subr.bf16.mxu0 0
        %700 = vmatpush1.bf16.msra.mxu0 %v662
        %701 = vmatprep.subr.bf16.mxu0 0
        %702 = vmatpush1.bf16.msra.mxu0 %v663
        %703 = vmatprep.subr.bf16.mxu0 0
        %704 = vmatpush1.bf16.msra.mxu0 %v664
        %705 = vmatprep.subr.bf16.mxu0 0
        %706 = vmatpush1.bf16.msra.mxu0 %v665
        %707 = vmatprep.subr.bf16.mxu0 0
        %708 = vmatpush1.bf16.msra.mxu0 %v666
        %709 = vmatprep.subr.bf16.mxu0 0
        %710 = vmatpush1.bf16.msra.mxu0 %v667
        %711 = vmatprep.subr.bf16.mxu0 0
        %712 = vmatpush1.bf16.msra.mxu0 %v668
        %713 = vmatprep.subr.bf16.mxu0 0
        %714 = vmatpush1.bf16.msra.mxu0 %v669
        %715 = vmatprep.subr.bf16.mxu0 0
        %716 = vmatpush1.bf16.msra.mxu0 %v670
        %717 = vmatprep.subr.bf16.mxu0 0
        %718 = vmatpush1.bf16.msra.mxu0 %v671
        %719 = vmatprep.subr.bf16.mxu0 0
        %720 = vmatpush1.bf16.msra.mxu0 %v672
        %721 = vmatprep.mubr.bf16.mxu0 %v530
        %722 = vmatmul.mubr.bf16.gmra.mrb[0].mxu0 %v529
        %v723 = vpop.f32.mrb[0].mxu0
        %v724 = vadd.f32 0.0, %v723
        %v725 = vpop.f32.mrb[0].mxu0
        %v726 = vpop.f32.mrb[0].mxu0
        %v727 = vadd.f32 0.0, %v726
        %v728 = vpop.f32.mrb[0].mxu0
        %729 = vmatprep.mubr.bf16.mxu0 %v532
        %730 = vmatmul.mubr.bf16.gmra.mrb[0].mxu0 %v531
        %v731 = vpop.f32.mrb[0].mxu0
        %v732 = vadd.f32 0.0, %v731
        %v733 = vpop.f32.mrb[0].mxu0
        %v734 = vpop.f32.mrb[0].mxu0
        %v735 = vadd.f32 0.0, %v734
        %v736 = vpop.f32.mrb[0].mxu0
        %737 = vmatprep.mubr.bf16.mxu0 %v534
        %738 = vmatmul.mubr.bf16.gmra.mrb[0].mxu0 %v533
        %v739 = vpop.f32.mrb[0].mxu0
        %v740 = vadd.f32 0.0, %v739
        %v741 = vpop.f32.mrb[0].mxu0
        %v742 = vpop.f32.mrb[0].mxu0
        %v743 = vadd.f32 0.0, %v742
        %v744 = vpop.f32.mrb[0].mxu0
        %745 = vmatprep.mubr.bf16.mxu0 %v536
        %746 = vmatmul.mubr.bf16.gmra.mrb[0].mxu0 %v535
        %v747 = vpop.f32.mrb[0].mxu0
        %v748 = vadd.f32 0.0, %v747
        %v749 = vpop.f32.mrb[0].mxu0
        %v750 = vpop.f32.mrb[0].mxu0
        %v751 = vadd.f32 0.0, %v750
        %v752 = vpop.f32.mrb[0].mxu0
        %753 = vmatprep.mubr.bf16.mxu0 %v538
        %754 = vmatmul.mubr.bf16.gmra.mrb[0].mxu0 %v537
        %v755 = vpop.f32.mrb[0].mxu0
        %v756 = vadd.f32 0.0, %v755
        %v757 = vpop.f32.mrb[0].mxu0
        %v758 = vpop.f32.mrb[0].mxu0
        %v759 = vadd.f32 0.0, %v758
        %v760 = vpop.f32.mrb[0].mxu0
        %761 = vmatprep.mubr.bf16.mxu0 %v540
        %762 = vmatmul.mubr.bf16.gmra.mrb[0].mxu0 %v539
        %v763 = vpop.f32.mrb[0].mxu0
        %v764 = vadd.f32 0.0, %v763
        %v765 = vpop.f32.mrb[0].mxu0
        %v766 = vpop.f32.mrb[0].mxu0
        %v767 = vadd.f32 0.0, %v766
        %v768 = vpop.f32.mrb[0].mxu0
        %769 = vmatprep.mubr.bf16.mxu0 %v542
        %770 = vmatmul.mubr.bf16.gmra.mrb[0].mxu0 %v541
        %v771 = vpop.f32.mrb[0].mxu0
        %v772 = vadd.f32 0.0, %v771
        %v773 = vpop.f32.mrb[0].mxu0
        %v774 = vpop.f32.mrb[0].mxu0
        %v775 = vadd.f32 0.0, %v774
        %v776 = vpop.f32.mrb[0].mxu0
        %777 = vmatprep.mubr.bf16.mxu0 %v544
        %778 = vmatmul.mubr.bf16.gmra.mrb[0].mxu0 %v543
        %v779 = vpop.f32.mrb[0].mxu0
        %v780 = vadd.f32 0.0, %v779
        %v781 = vpop.f32.mrb[0].mxu0
        %v782 = vpop.f32.mrb[0].mxu0
        %v783 = vadd.f32 0.0, %v782
        %v784 = vpop.f32.mrb[0].mxu0
        %785 = vmatprep.mubr.bf16.mxu0 %v546
        %786 = vmatmul.mubr.bf16.gmra.mrb[0].mxu0 %v545
        %v787 = vpop.f32.mrb[0].mxu0
        %v788 = vadd.f32 0.0, %v787
        %v789 = vpop.f32.mrb[0].mxu0
        %v790 = vpop.f32.mrb[0].mxu0
        %v791 = vadd.f32 0.0, %v790
        %v792 = vpop.f32.mrb[0].mxu0
        %793 = vmatprep.mubr.bf16.mxu0 %v548
        %794 = vmatmul.mubr.bf16.gmra.mrb[0].mxu0 %v547
        %v795 = vpop.f32.mrb[0].mxu0
        %v796 = vadd.f32 0.0, %v795
        %v797 = vpop.f32.mrb[0].mxu0
        %v798 = vpop.f32.mrb[0].mxu0
        %v799 = vadd.f32 0.0, %v798
        %v800 = vpop.f32.mrb[0].mxu0
        %801 = vmatprep.mubr.bf16.mxu0 %v550
        %802 = vmatmul.mubr.bf16.gmra.mrb[0].mxu0 %v549
        %v803 = vpop.f32.mrb[0].mxu0
        %v804 = vadd.f32 0.0, %v803
        %v805 = vpop.f32.mrb[0].mxu0
        %v806 = vpop.f32.mrb[0].mxu0
        %v807 = vadd.f32 0.0, %v806
        %v808 = vpop.f32.mrb[0].mxu0
        %809 = vmatprep.mubr.bf16.mxu0 %v552
        %810 = vmatmul.mubr.bf16.gmra.mrb[0].mxu0 %v551
        %v811 = vpop.f32.mrb[0].mxu0
        %v812 = vadd.f32 0.0, %v811
        %v813 = vpop.f32.mrb[0].mxu0
        %v814 = vpop.f32.mrb[0].mxu0
        %v815 = vadd.f32 0.0, %v814
        %v816 = vpop.f32.mrb[0].mxu0
        %817 = vmatprep.mubr.bf16.mxu0 %v554
        %818 = vmatmul.mubr.bf16.gmra.mrb[0].mxu0 %v553
        %v819 = vpop.f32.mrb[0].mxu0
        %v820 = vadd.f32 0.0, %v819
        %v821 = vpop.f32.mrb[0].mxu0
        %v822 = vpop.f32.mrb[0].mxu0
        %v823 = vadd.f32 0.0, %v822
        %v824 = vpop.f32.mrb[0].mxu0
        %825 = vmatprep.mubr.bf16.mxu0 %v556
        %826 = vmatmul.mubr.bf16.gmra.mrb[0].mxu0 %v555
        %v827 = vpop.f32.mrb[0].mxu0
        %v828 = vadd.f32 0.0, %v827
        %v829 = vpop.f32.mrb[0].mxu0
        %v830 = vpop.f32.mrb[0].mxu0
        %v831 = vadd.f32 0.0, %v830
        %v832 = vpop.f32.mrb[0].mxu0
        %833 = vmatprep.mubr.bf16.mxu0 %v558
        %834 = vmatmul.mubr.bf16.gmra.mrb[0].mxu0 %v557
        %v835 = vpop.f32.mrb[0].mxu0
        %v836 = vadd.f32 0.0, %v835
        %v837 = vpop.f32.mrb[0].mxu0
        %v838 = vpop.f32.mrb[0].mxu0
        %v839 = vadd.f32 0.0, %v838
        %v840 = vpop.f32.mrb[0].mxu0
        %841 = vmatprep.mubr.bf16.mxu0 %v560
        %842 = vmatmul.mubr.bf16.gmra.mrb[0].mxu0 %v559
        %v843 = vpop.f32.mrb[0].mxu0
        %v844 = vadd.f32 0.0, %v843
        %v845 = vpop.f32.mrb[0].mxu0
        %v846 = vpop.f32.mrb[0].mxu0
        %v847 = vadd.f32 0.0, %v846
        %v848 = vpop.f32.mrb[0].mxu0
        %849 = vdwg.mxu0
        %v850 = vadd.f32 %v337, %v724
        %v851 = vadd.f32 %v338, %v727
        %v852 = vadd.f32 %v339, %v732
        %v853 = vadd.f32 %v340, %v735
        %v854 = vadd.f32 %v341, %v740
        %v855 = vadd.f32 %v342, %v743
        %v856 = vadd.f32 %v343, %v748
        %v857 = vadd.f32 %v344, %v751
        %v858 = vadd.f32 %v345, %v756
        %v859 = vadd.f32 %v346, %v759
        %v860 = vadd.f32 %v347, %v764
        %v861 = vadd.f32 %v348, %v767
        %v862 = vadd.f32 %v349, %v772
        %v863 = vadd.f32 %v350, %v775
        %v864 = vadd.f32 %v351, %v780
        %v865 = vadd.f32 %v352, %v783
        %v866 = vadd.f32 %v353, %v788
        %v867 = vadd.f32 %v354, %v791
        %v868 = vadd.f32 %v355, %v796
        %v869 = vadd.f32 %v356, %v799
        %v870 = vadd.f32 %v357, %v804
        %v871 = vadd.f32 %v358, %v807
        %v872 = vadd.f32 %v359, %v812
        %v873 = vadd.f32 %v360, %v815
        %v874 = vadd.f32 %v361, %v820
        %v875 = vadd.f32 %v362, %v823
        %v876 = vadd.f32 %v363, %v828
        %v877 = vadd.f32 %v364, %v831
        %v878 = vadd.f32 %v365, %v836
        %v879 = vadd.f32 %v366, %v839
        %v880 = vadd.f32 %v367, %v844
        %v881 = vadd.f32 %v368, %v847
        %882 = vst [vmem:[#allocation2] sm:$0xff] %v850
        %883 = vst [vmem:[#allocation2 + $0x8] sm:$0xff] %v851
        %884 = vst [vmem:[#allocation2 + $0x10] sm:$0xff] %v852
        %885 = vst [vmem:[#allocation2 + $0x18] sm:$0xff] %v853
        %886 = vst [vmem:[#allocation2 + $0x20] sm:$0xff] %v854
        %887 = vst [vmem:[#allocation2 + $0x28] sm:$0xff] %v855
        %888 = vst [vmem:[#allocation2 + $0x30] sm:$0xff] %v856
        %889 = vst [vmem:[#allocation2 + $0x38] sm:$0xff] %v857
        %890 = vst [vmem:[#allocation2 + $0x40] sm:$0xff] %v858
        %891 = vst [vmem:[#allocation2 + $0x48] sm:$0xff] %v859
        %892 = vst [vmem:[#allocation2 + $0x50] sm:$0xff] %v860
        %893 = vst [vmem:[#allocation2 + $0x58] sm:$0xff] %v861
        %894 = vst [vmem:[#allocation2 + $0x60] sm:$0xff] %v862
        %895 = vst [vmem:[#allocation2 + $0x68] sm:$0xff] %v863
        %896 = vst [vmem:[#allocation2 + $0x70] sm:$0xff] %v864
        %897 = vst [vmem:[#allocation2 + $0x78] sm:$0xff] %v865
        %898 = vst [vmem:[#allocation2 + $0x80] sm:$0xff] %v866
        %899 = vst [vmem:[#allocation2 + $0x88] sm:$0xff] %v867
        %900 = vst [vmem:[#allocation2 + $0x90] sm:$0xff] %v868
        %901 = vst [vmem:[#allocation2 + $0x98] sm:$0xff] %v869
        %902 = vst [vmem:[#allocation2 + $0xa0] sm:$0xff] %v870
        %903 = vst [vmem:[#allocation2 + $0xa8] sm:$0xff] %v871
        %904 = vst [vmem:[#allocation2 + $0xb0] sm:$0xff] %v872
        %905 = vst [vmem:[#allocation2 + $0xb8] sm:$0xff] %v873
        %906 = vst [vmem:[#allocation2 + $0xc0] sm:$0xff] %v874
        %907 = vst [vmem:[#allocation2 + $0xc8] sm:$0xff] %v875
        %908 = vst [vmem:[#allocation2 + $0xd0] sm:$0xff] %v876
        %909 = vst [vmem:[#allocation2 + $0xd8] sm:$0xff] %v877
        %910 = vst [vmem:[#allocation2 + $0xe0] sm:$0xff] %v878
        %911 = vst [vmem:[#allocation2 + $0xe8] sm:$0xff] %v879
        %912 = vst [vmem:[#allocation2 + $0xf0] sm:$0xff] %v880
        %913 = vst [vmem:[#allocation2 + $0xf8] sm:$0xff] %v881
        // Predicated region
        $region41: #{conv2d_affine.1} parent=35 // pred_check
          %p914 = pneg %p301
        $region42: #{conv2d_affine.1} parent=35 // pred_check_branch
          %916 = sbr.rel (%p914) target = $region44
        $region43: #{conv2d_affine.1} parent=35 // pred_region
          %v917 = vld [vmem:[#allocation2] sm:$0xff]
          %v918 = vld [vmem:[#allocation2 + $0x8] sm:$0xff]
          %v919 = vld [vmem:[#allocation2 + $0x10] sm:$0xff]
          %v920 = vld [vmem:[#allocation2 + $0x18] sm:$0xff]
          %v921 = vld [vmem:[#allocation2 + $0x20] sm:$0xff]
          %v922 = vld [vmem:[#allocation2 + $0x28] sm:$0xff]
          %v923 = vld [vmem:[#allocation2 + $0x30] sm:$0xff]
          %v924 = vld [vmem:[#allocation2 + $0x38] sm:$0xff]
          %v925 = vld [vmem:[#allocation2 + $0x40] sm:$0xff]
          %v926 = vld [vmem:[#allocation2 + $0x48] sm:$0xff]
          %v927 = vld [vmem:[#allocation2 + $0x50] sm:$0xff]
          %v928 = vld [vmem:[#allocation2 + $0x58] sm:$0xff]
          %v929 = vld [vmem:[#allocation2 + $0x60] sm:$0xff]
          %v930 = vld [vmem:[#allocation2 + $0x68] sm:$0xff]
          %v931 = vld [vmem:[#allocation2 + $0x70] sm:$0xff]
          %v932 = vld [vmem:[#allocation2 + $0x78] sm:$0xff]
          %v933 = vld [vmem:[#allocation2 + $0x80] sm:$0xff]
          %v934 = vld [vmem:[#allocation2 + $0x88] sm:$0xff]
          %v935 = vld [vmem:[#allocation2 + $0x90] sm:$0xff]
          %v936 = vld [vmem:[#allocation2 + $0x98] sm:$0xff]
          %v937 = vld [vmem:[#allocation2 + $0xa0] sm:$0xff]
          %v938 = vld [vmem:[#allocation2 + $0xa8] sm:$0xff]
          %v939 = vld [vmem:[#allocation2 + $0xb0] sm:$0xff]
          %v940 = vld [vmem:[#allocation2 + $0xb8] sm:$0xff]
          %v941 = vld [vmem:[#allocation2 + $0xc0] sm:$0xff]
          %v942 = vld [vmem:[#allocation2 + $0xc8] sm:$0xff]
          %v943 = vld [vmem:[#allocation2 + $0xd0] sm:$0xff]
          %v944 = vld [vmem:[#allocation2 + $0xd8] sm:$0xff]
          %v945 = vld [vmem:[#allocation2 + $0xe0] sm:$0xff]
          %v946 = vld [vmem:[#allocation2 + $0xe8] sm:$0xff]
          %v947 = vld [vmem:[#allocation2 + $0xf0] sm:$0xff]
          %v948 = vld [vmem:[#allocation2 + $0xf8] sm:$0xff]
          %v949 = vld [vmem:[%s295] sm:$0x1]
          %v951 = vlaneseq
          %v952 = vshrl.u32 %v951, 7
          %v953 = vsub.s32 0, %v952
          %v954 = vrot.slane %v949, %v953
          %v956 = vmul.f32 %v917, %v954
          %v957 = vmul.f32 %v918, %v954
          %v958 = vmul.f32 %v919, %v954
          %v959 = vmul.f32 %v920, %v954
          %v960 = vmul.f32 %v921, %v954
          %v961 = vmul.f32 %v922, %v954
          %v962 = vmul.f32 %v923, %v954
          %v963 = vmul.f32 %v924, %v954
          %v964 = vmul.f32 %v925, %v954
          %v965 = vmul.f32 %v926, %v954
          %v966 = vmul.f32 %v927, %v954
          %v967 = vmul.f32 %v928, %v954
          %v968 = vmul.f32 %v929, %v954
          %v969 = vmul.f32 %v930, %v954
          %v970 = vmul.f32 %v931, %v954
          %v971 = vmul.f32 %v932, %v954
          %v972 = vmul.f32 %v933, %v954
          %v973 = vmul.f32 %v934, %v954
          %v974 = vmul.f32 %v935, %v954
          %v975 = vmul.f32 %v936, %v954
          %v976 = vmul.f32 %v937, %v954
          %v977 = vmul.f32 %v938, %v954
          %v978 = vmul.f32 %v939, %v954
          %v979 = vmul.f32 %v940, %v954
          %v980 = vmul.f32 %v941, %v954
          %v981 = vmul.f32 %v942, %v954
          %v982 = vmul.f32 %v943, %v954
          %v983 = vmul.f32 %v944, %v954
          %v984 = vmul.f32 %v945, %v954
          %v985 = vmul.f32 %v946, %v954
          %v986 = vmul.f32 %v947, %v954
          %v987 = vmul.f32 %v948, %v954
          %v988 = vld [vmem:[%s298] sm:$0x1]
          %v990 = vlaneseq
          %v991 = vshrl.u32 %v990, 7
          %v992 = vsub.s32 0, %v991
          %v993 = vrot.slane %v988, %v992
          %v995 = vadd.f32 %v956, %v993
          %v996 = vadd.f32 %v957, %v993
          %v997 = vadd.f32 %v958, %v993
          %v998 = vadd.f32 %v959, %v993
          %v999 = vadd.f32 %v960, %v993
          %v1000 = vadd.f32 %v961, %v993
          %v1001 = vadd.f32 %v962, %v993
          %v1002 = vadd.f32 %v963, %v993
          %v1003 = vadd.f32 %v964, %v993
          %v1004 = vadd.f32 %v965, %v993
          %v1005 = vadd.f32 %v966, %v993
          %v1006 = vadd.f32 %v967, %v993
          %v1007 = vadd.f32 %v968, %v993
          %v1008 = vadd.f32 %v969, %v993
          %v1009 = vadd.f32 %v970, %v993
          %v1010 = vadd.f32 %v971, %v993
          %v1011 = vadd.f32 %v972, %v993
          %v1012 = vadd.f32 %v973, %v993
          %v1013 = vadd.f32 %v974, %v993
          %v1014 = vadd.f32 %v975, %v993
          %v1015 = vadd.f32 %v976, %v993
          %v1016 = vadd.f32 %v977, %v993
          %v1017 = vadd.f32 %v978, %v993
          %v1018 = vadd.f32 %v979, %v993
          %v1019 = vadd.f32 %v980, %v993
          %v1020 = vadd.f32 %v981, %v993
          %v1021 = vadd.f32 %v982, %v993
          %v1022 = vadd.f32 %v983, %v993
          %v1023 = vadd.f32 %v984, %v993
          %v1024 = vadd.f32 %v985, %v993
          %v1025 = vadd.f32 %v986, %v993
          %v1026 = vadd.f32 %v987, %v993
          %v1027 = vmax.f32 %v995, 0.0
          %v1028 = vmax.f32 %v996, 0.0
          %v1029 = vmax.f32 %v997, 0.0
          %v1030 = vmax.f32 %v998, 0.0
          %v1031 = vmax.f32 %v999, 0.0
          %v1032 = vmax.f32 %v1000, 0.0
          %v1033 = vmax.f32 %v1001, 0.0
          %v1034 = vmax.f32 %v1002, 0.0
          %v1035 = vmax.f32 %v1003, 0.0
          %v1036 = vmax.f32 %v1004, 0.0
          %v1037 = vmax.f32 %v1005, 0.0
          %v1038 = vmax.f32 %v1006, 0.0
          %v1039 = vmax.f32 %v1007, 0.0
          %v1040 = vmax.f32 %v1008, 0.0
          %v1041 = vmax.f32 %v1009, 0.0
          %v1042 = vmax.f32 %v1010, 0.0
          %v1043 = vmax.f32 %v1011, 0.0
          %v1044 = vmax.f32 %v1012, 0.0
          %v1045 = vmax.f32 %v1013, 0.0
          %v1046 = vmax.f32 %v1014, 0.0
          %v1047 = vmax.f32 %v1015, 0.0
          %v1048 = vmax.f32 %v1016, 0.0
          %v1049 = vmax.f32 %v1017, 0.0
          %v1050 = vmax.f32 %v1018, 0.0
          %v1051 = vmax.f32 %v1019, 0.0
          %v1052 = vmax.f32 %v1020, 0.0
          %v1053 = vmax.f32 %v1021, 0.0
          %v1054 = vmax.f32 %v1022, 0.0
          %v1055 = vmax.f32 %v1023, 0.0
          %v1056 = vmax.f32 %v1024, 0.0
          %v1057 = vmax.f32 %v1025, 0.0
          %v1058 = vmax.f32 %v1026, 0.0
          %v1059 = vpack.c.bf16 %v1028, %v1027
          %v1060 = vpack.c.bf16 %v1030, %v1029
          %v1061 = vpack.c.bf16 %v1032, %v1031
          %v1062 = vpack.c.bf16 %v1034, %v1033
          %v1063 = vpack.c.bf16 %v1036, %v1035
          %v1064 = vpack.c.bf16 %v1038, %v1037
          %v1065 = vpack.c.bf16 %v1040, %v1039
          %v1066 = vpack.c.bf16 %v1042, %v1041
          %v1067 = vpack.c.bf16 %v1044, %v1043
          %v1068 = vpack.c.bf16 %v1046, %v1045
          %v1069 = vpack.c.bf16 %v1048, %v1047
          %v1070 = vpack.c.bf16 %v1050, %v1049
          %v1071 = vpack.c.bf16 %v1052, %v1051
          %v1072 = vpack.c.bf16 %v1054, %v1053
          %v1073 = vpack.c.bf16 %v1056, %v1055
          %v1074 = vpack.c.bf16 %v1058, %v1057
          %v1091 = vunpack.c.l.b16 %v1059
          %v1092 = vunpack.c.h.b16 %v1059
          %v1093 = vunpack.c.l.b16 %v1060
          %v1094 = vunpack.c.h.b16 %v1060
          %v1095 = vunpack.c.l.b16 %v1061
          %v1096 = vunpack.c.h.b16 %v1061
          %v1097 = vunpack.c.l.b16 %v1062
          %v1098 = vunpack.c.h.b16 %v1062
          %v1099 = vunpack.c.l.b16 %v1063
          %v1100 = vunpack.c.h.b16 %v1063
          %v1101 = vunpack.c.l.b16 %v1064
          %v1102 = vunpack.c.h.b16 %v1064
          %v1103 = vunpack.c.l.b16 %v1065
          %v1104 = vunpack.c.h.b16 %v1065
          %v1105 = vunpack.c.l.b16 %v1066
          %v1106 = vunpack.c.h.b16 %v1066
          %v1107 = vunpack.c.l.b16 %v1067
          %v1108 = vunpack.c.h.b16 %v1067
          %v1109 = vunpack.c.l.b16 %v1068
          %v1110 = vunpack.c.h.b16 %v1068
          %v1111 = vunpack.c.l.b16 %v1069
          %v1112 = vunpack.c.h.b16 %v1069
          %v1113 = vunpack.c.l.b16 %v1070
          %v1114 = vunpack.c.h.b16 %v1070
          %v1115 = vunpack.c.l.b16 %v1071
          %v1116 = vunpack.c.h.b16 %v1071
          %v1117 = vunpack.c.l.b16 %v1072
          %v1118 = vunpack.c.h.b16 %v1072
          %v1119 = vunpack.c.l.b16 %v1073
          %v1120 = vunpack.c.h.b16 %v1073
          %v1121 = vunpack.c.l.b16 %v1074
          %v1122 = vunpack.c.h.b16 %v1074
          %v1123 = vpack.c.b16 %v1091, %v1091
          %v1124 = vpack.c.b16 %v1092, %v1092
          %v1125 = vpack.c.b16 %v1093, %v1093
          %v1126 = vpack.c.b16 %v1094, %v1094
          %v1127 = vpack.c.b16 %v1095, %v1095
          %v1128 = vpack.c.b16 %v1096, %v1096
          %v1129 = vpack.c.b16 %v1097, %v1097
          %v1130 = vpack.c.b16 %v1098, %v1098
          %v1131 = vpack.c.b16 %v1099, %v1099
          %v1132 = vpack.c.b16 %v1100, %v1100
          %v1133 = vpack.c.b16 %v1101, %v1101
          %v1134 = vpack.c.b16 %v1102, %v1102
          %v1135 = vpack.c.b16 %v1103, %v1103
          %v1136 = vpack.c.b16 %v1104, %v1104
          %v1137 = vpack.c.b16 %v1105, %v1105
          %v1138 = vpack.c.b16 %v1106, %v1106
          %v1139 = vpack.c.b16 %v1107, %v1107
          %v1140 = vpack.c.b16 %v1108, %v1108
          %v1141 = vpack.c.b16 %v1109, %v1109
          %v1142 = vpack.c.b16 %v1110, %v1110
          %v1143 = vpack.c.b16 %v1111, %v1111
          %v1144 = vpack.c.b16 %v1112, %v1112
          %v1145 = vpack.c.b16 %v1113, %v1113
          %v1146 = vpack.c.b16 %v1114, %v1114
          %v1147 = vpack.c.b16 %v1115, %v1115
          %v1148 = vpack.c.b16 %v1116, %v1116
          %v1149 = vpack.c.b16 %v1117, %v1117
          %v1150 = vpack.c.b16 %v1118, %v1118
          %v1151 = vpack.c.b16 %v1119, %v1119
          %v1152 = vpack.c.b16 %v1120, %v1120
          %v1153 = vpack.c.b16 %v1121, %v1121
          %v1154 = vpack.c.b16 %v1122, %v1122
          %1187 = vst [vmem:[%s271] sm:$0xf] %v1123
          %1188 = vst [vmem:[%s271 + $0x4] sm:$0xf] %v1124
          %1189 = vst [vmem:[%s271 + $0x8] sm:$0xf] %v1125
          %1190 = vst [vmem:[%s271 + $0xc] sm:$0xf] %v1126
          %1191 = vst [vmem:[%s271 + $0x10] sm:$0xf] %v1127
          %1192 = vst [vmem:[%s271 + $0x14] sm:$0xf] %v1128
          %1193 = vst [vmem:[%s271 + $0x18] sm:$0xf] %v1129
          %1194 = vst [vmem:[%s271 + $0x1c] sm:$0xf] %v1130
          %1195 = vst [vmem:[%s271 + $0x20] sm:$0xf] %v1131
          %1196 = vst [vmem:[%s271 + $0x24] sm:$0xf] %v1132
          %1197 = vst [vmem:[%s271 + $0x28] sm:$0xf] %v1133
          %1198 = vst [vmem:[%s271 + $0x2c] sm:$0xf] %v1134
          %1199 = vst [vmem:[%s271 + $0x30] sm:$0xf] %v1135
          %1200 = vst [vmem:[%s271 + $0x34] sm:$0xf] %v1136
          %1201 = vst [vmem:[%s271 + $0x38] sm:$0xf] %v1137
          %1202 = vst [vmem:[%s271 + $0x3c] sm:$0xf] %v1138
          %1203 = vst [vmem:[%s271 + $0x40] sm:$0xf] %v1139
          %1204 = vst [vmem:[%s271 + $0x44] sm:$0xf] %v1140
          %1205 = vst [vmem:[%s271 + $0x48] sm:$0xf] %v1141
          %1206 = vst [vmem:[%s271 + $0x4c] sm:$0xf] %v1142
          %1207 = vst [vmem:[%s271 + $0x50] sm:$0xf] %v1143
          %1208 = vst [vmem:[%s271 + $0x54] sm:$0xf] %v1144
          %1209 = vst [vmem:[%s271 + $0x58] sm:$0xf] %v1145
          %1210 = vst [vmem:[%s271 + $0x5c] sm:$0xf] %v1146
          %1211 = vst [vmem:[%s271 + $0x60] sm:$0xf] %v1147
          %1212 = vst [vmem:[%s271 + $0x64] sm:$0xf] %v1148
          %1213 = vst [vmem:[%s271 + $0x68] sm:$0xf] %v1149
          %1214 = vst [vmem:[%s271 + $0x6c] sm:$0xf] %v1150
          %1215 = vst [vmem:[%s271 + $0x70] sm:$0xf] %v1151
          %1216 = vst [vmem:[%s271 + $0x74] sm:$0xf] %v1152
          %1217 = vst [vmem:[%s271 + $0x78] sm:$0xf] %v1153
          %1218 = vst [vmem:[%s271 + $0x7c] sm:$0xf] %v1154
        $region44: #{conv2d_affine.1} parent=35 // pred_fallthru
          _
        %s1219 = sand.u32 %s155, 1
        %s1220 = scalar_lea.sflag [#allocation4], %s1219
        %s1221 = sand.u32 %s155, 1
        %s1222 = smul.addr %s1221, 128
        %s1223 = scalar_lea.vmem [#allocation3], %s1222
        // Predicated region
        $region45: #{conv2d_affine.1} parent=35 // pred_check
          %p1224 = pneg %p165
        $region46: #{conv2d_affine.1} parent=35 // pred_check_branch
          %1226 = sbr.rel (%p1224) target = $region48
        $region47: #{conv2d_affine.1} parent=35 // pred_region
          %s1227 = smul.u32 32, %s23
          %s1229 = ssub.s32 2048, 2048
          %1230 = vsyncadd %s1220, %s1229
          %s1231 = sadd.s32 %s24, %s1227
          %s1232 = smul.addr %s1231, 64
          %s1233 = scalar_lea.hbm %s4, %s1232
          %s1234 = sshll.u32 %s1223, 4
          %s1235 = int_to_ptr.vmem [resolvable:$true] %s1234
          %1240 = dma.vmem_to_hbm [thread:$0]  %s1235, 2048, %s1233, %s1220, 64, 64, 4
        $region48: #{conv2d_affine.1} parent=35 // pred_fallthru
          _
      $region36: #{conv2d_affine.1} parent=5 // pred_fallthru
        _
      %p1241 = scmp.le.s32.totalorder 2, %s13
      // Predicated region
      $region49: #{conv2d_affine.1} parent=5 // pred_check
        %p1242 = pneg %p1241
      $region50: #{conv2d_affine.1} parent=5 // pred_check_branch
        %1244 = sbr.rel (%p1242) target = $region52
      $region51: #{conv2d_affine.1} parent=5 // pred_region
        %s1245 = ssub.s32 %s13, 2
        // Predicated region
        $region53: #{conv2d_affine.1} parent=51 // pred_check
          %p1246 = pneg %p171
        $region54: #{conv2d_affine.1} parent=51 // pred_check_branch
          %1248 = sbr.rel (%p1246) target = $region56
        $region55: #{conv2d_affine.1} parent=51 // pred_region
          %s1249 = sand.u32 %s156, 1
          %s1250 = scalar_lea.sflag [#allocation4], %s1249
          %s1251 = sand.u32 %s156, 1
          %s1252 = smul.addr %s1251, 128
          %s1253 = scalar_lea.vmem [#allocation3], %s1252
          %1254 = dma.done %s1250, 2048
        $region56: #{conv2d_affine.1} parent=51 // pred_fallthru
          _
      $region52: #{conv2d_affine.1} parent=5 // pred_fallthru
        _
    $region6: #{conv2d_affine.1} parent=1 // loop_footer
      %s17 = sadd.s32 1, %s13
    $region7: #{conv2d_affine.1} parent=1 // loop_footer_branch
      %12 = sbr.rel target = $region3
    $region8: #{conv2d_affine.1} parent=1 // loop_exit
      _
    %1255 = vsyncpa [#allocation4], 1
    %s1256 = scalar_lea.sflag [#allocation4], 1
    %1257 = vsyncpa %s1256, 1

</llo_original>
